<compile_context>
chip_gen: v7x
topology: tpu7x:2x2x1
jax: 0.10.0
libtpu: 0.0.40
codegen_flags: <defaults>
</compile_context>

<pallas_src>
import functools

import numpy as np
import jax
import jax.numpy as jnp
from jax import lax
from jax.experimental import pallas as pl
from jax.experimental.pallas import tpu as pltpu


def _round_up(x, m):
    return ((x + m - 1) // m) * m


def _vmem_capacity_bytes():
    """Per-TensorCore VMEM capacity; conservative fallback = v7x (64 MiB)."""
    try:
        cap = getattr(pltpu.get_tpu_info(), "vmem_capacity_bytes", None)
        if cap:
            return int(cap)
    except Exception:
        pass
    return 64 << 20


# ----------------------------- Pallas kernel ------------------------------- #

def _embed_ln_kernel(x_ref, w_ref, p_ref, gamma_ref, beta_ref, out_ref, *,
                     cat_cols, vocab_offsets, out_dim, eps):
    tm = x_ref.shape[0]
    v_total = w_ref.shape[0]
    out_pad = out_ref.shape[1]

    xin = x_ref[...]                                    # (tm, F) raw feature rows

    # Summed one-hot over the combined block-diagonal vocabulary.  Column ids
    # live in disjoint [offset, offset+vocab) ranges, so the sum has exactly one
    # 1 per categorical column.  Accumulate directly in f32 (no int cast pass).
    # Categorical ids arrive as floats (as in the PyTorch module, which calls
    # .long()); the int32 truncation below matches .long() for ids < 2^24.
    iota = lax.broadcasted_iota(jnp.int32, (tm, v_total), 1)
    onehot = None
    for c, voff in zip(cat_cols, vocab_offsets):        # tiny static loop
        idx = xin[:, c:c + 1].astype(jnp.int32) + voff  # (tm, 1)
        term = (iota == idx).astype(jnp.float32)
        onehot = term if onehot is None else onehot + term

    # Embeddings -> output columns [n_cont, n_cont+d_total) (table pre-placed);
    # continuous columns -> output columns [0, n_cont) via the selector matmul
    # (zero rows for categorical columns, so raw ids contribute nothing).
    feat = jnp.dot(onehot, w_ref[...], preferred_element_type=jnp.float32)
    feat = feat + jnp.dot(xin, p_ref[...], preferred_element_type=jnp.float32)

    # Two-pass LayerNorm over the real out_dim columns.  Pad columns of `feat`
    # are exactly 0, so the mean is exact; after centering, each pad lane
    # contributes mean^2 to the sum of squares -> subtract it in closed form.
    inv_n = jnp.float32(1.0 / out_dim)
    n_pad = jnp.float32(out_pad - out_dim)
    mean = jnp.sum(feat, axis=-1, keepdims=True) * inv_n
    d = feat - mean
    var = (jnp.sum(d * d, axis=-1, keepdims=True) - n_pad * mean * mean) * inv_n
    var = jnp.maximum(var, 0.0)
    rstd = lax.rsqrt(var + eps)

    # Lane-dense store; padded gamma/beta are 0 so pad columns write 0.
    out_ref[...] = (d * rstd * gamma_ref[...] + beta_ref[...]).astype(out_ref.dtype)


# ------------------------------ JAX wrapper -------------------------------- #

def call_records_embeddings(x, cont_cols, cat_cols, vocab_offsets, vocab_sizes,
                            w_blockdiag, gamma, beta, *, eps=1e-5,
                            out_dtype=jnp.float32, tm_cap=None):
    b, s, f = x.shape
    rows = b * s
    n_cont = len(cont_cols)
    n_cat = len(cat_cols)
    assert n_cat >= 1, "module always has at least one embedding item"
    v_total, d_total = w_blockdiag.shape
    out_dim = n_cont + d_total
    out_pad = _round_up(out_dim, 128)

    # Correctness invariant for the summed one-hot: per-column id ranges must be
    # disjoint inside the block-diagonal table.
    offs = list(vocab_offsets) + [v_total]
    assert all(offs[j] + vocab_sizes[j] <= offs[j + 1] for j in range(n_cat)), \
        "vocab offsets/sizes overlap; summed one-hot formulation would be wrong"

    # ---- generation-aware VMEM budget and adaptive row tile ------------------
    vmem_budget = int(_vmem_capacity_bytes() * 0.70)    # ~45 MiB v7x, ~90 MiB v5e/v6e
    f_pad = _round_up(f, 128)                           # input tile lane-padded in VMEM
    v_pad = _round_up(v_total, 128)

    def vmem_estimate(tm):
        by = 4
        return (2 * tm * f_pad * by                     # input double buffer (padded)
                + _round_up(v_total, 8) * out_pad * by  # table (single-buffered)
                + _round_up(f, 8) * out_pad * by        # cont selector
                + 2 * 8 * out_pad * by                  # gamma, beta
                + 2 * tm * out_pad * by                 # output double buffer
                + 3 * tm * v_pad * by                   # iota + compare + one-hot acc
                + 2 * tm * out_pad * by)                # feat + normalized temps

    candidates = [c for c in (2048, 1024, 512, 256, 128)
                  if tm_cap is None or c <= tm_cap]
    tm_budget = next((c for c in candidates if vmem_estimate(c) <= vmem_budget), None)
    if tm_budget is None:
        # TODO(synk): DMA row-gather path (table in HBM via memory_space=pl.ANY +
        # scalar-prefetched ids) for large combined vocabularies.
        raise NotImplementedError(
            "combined vocabulary too large for the one-hot formulation")

    if rows <= 128:
        tm = rows                                       # single full-extent block
    else:
        # keep >= 2 grid steps so the 'parallel' row axis spans both v7x TCs
        tm = min(tm_budget, max(128, _round_up((rows + 1) // 2, 128)))
    grid = (pl.cdiv(rows, tm),)                         # ragged last block is fine

    # ---- constant operands (built once per call; cache these in real use) ----
    w_pad = np.zeros((v_total, out_pad), np.float32)
    w_pad[:, n_cont:n_cont + d_total] = np.asarray(w_blockdiag, np.float32)
    p_sel = np.zeros((f, out_pad), np.float32)          # cont col c -> out col j
    for j, c in enumerate(cont_cols):
        p_sel[c, j] = 1.0
    gamma_p = np.zeros((1, out_pad), np.float32)
    gamma_p[0, :out_dim] = np.asarray(gamma, np.float32)
    beta_p = np.zeros((1, out_pad), np.float32)
    beta_p[0, :out_dim] = np.asarray(beta, np.float32)

    xf = x.reshape(rows, f).astype(jnp.float32)         # no pack / pad pre-pass

    kernel = functools.partial(
        _embed_ln_kernel,
        cat_cols=tuple(int(c) for c in cat_cols),
        vocab_offsets=tuple(int(o) for o in vocab_offsets),
        out_dim=out_dim, eps=float(eps))

    cost = pl.CostEstimate(
        flops=int(2 * rows * out_pad * (v_total + f)),
        transcendentals=int(rows),
        bytes_accessed=int(rows * (f + out_pad) * 4 + (v_total + f + 2) * out_pad * 4))

    def build_call(single_buffer_consts):
        const_kw = ({"pipeline_mode": pl.Buffered(1)} if single_buffer_consts else {})
        in_specs = [
            pl.BlockSpec((tm, f), lambda i: (i, 0)),                       # raw rows
            pl.BlockSpec((v_total, out_pad), lambda i: (0, 0), **const_kw),  # table
            pl.BlockSpec((f, out_pad), lambda i: (0, 0), **const_kw),        # selector
            pl.BlockSpec((1, out_pad), lambda i: (0, 0), **const_kw),        # gamma
            pl.BlockSpec((1, out_pad), lambda i: (0, 0), **const_kw),        # beta
        ]
        return pl.pallas_call(
            kernel,
            out_shape=jax.ShapeDtypeStruct((rows, out_pad), out_dtype),
            grid_spec=pltpu.PrefetchScalarGridSpec(
                num_scalar_prefetch=0, grid=grid,
                in_specs=in_specs,
                out_specs=pl.BlockSpec((tm, out_pad), lambda i: (i, 0))),   # lane-dense
            compiler_params=pltpu.CompilerParams(
                dimension_semantics=("parallel",),      # rows independent -> 2 TCs on v7x
                vmem_limit_bytes=vmem_budget),
            cost_estimate=cost,
        )

    args = (xf, jnp.asarray(w_pad), jnp.asarray(p_sel),
            jnp.asarray(gamma_p), jnp.asarray(beta_p))
    try:
        out = build_call(True)(*args)
    except Exception:
        # pl.Buffered(1) single-buffering rejected by this jax build -> default
        # double buffering (costs one extra table copy in VMEM, nothing else).
        out = build_call(False)(*args)

    # Keep the padded (rows, out_pad) slab downstream if possible; this slice is
    # only to return the module's exact output shape.
    return out[:, :out_dim].reshape(b, s, out_dim)


# --------------------------- reference (plain JAX) -------------------------- #

def reference(x, items, tables, gamma, beta, eps=1e-5):
    b, s, f = x.shape
    emb_list = []
    for item, tbl in zip(items, tables):
        idx = x[:, :, jnp.asarray(item["x_col_index"])].astype(jnp.int32)
        e = tbl[idx]                                     # (b, s, n_cols, d)
        emb_list.append(e.reshape(b, s, -1))
    embs = jnp.concatenate(emb_list, axis=-1)
    del_idx = [c for item in items for c in item["x_col_index"]]
    mask = np.ones(f, dtype=bool)
    mask[del_idx] = False
    feat = jnp.concatenate([x[:, :, np.where(mask)[0]], embs], axis=-1)
    mean = feat.mean(-1, keepdims=True)
    var = ((feat - mean) ** 2).mean(-1, keepdims=True)
    return (feat - mean) / jnp.sqrt(var + eps) * gamma + beta


# ---------------------------------- main ----------------------------------- #

if __name__ == "__main__":
    key = jax.random.PRNGKey(0)
    k_a, k_b, k_cat1, k_cat2, k_cont = jax.random.split(key, 5)

    B, SEQ, F_DIM = 2, 8, 8
    PADDING_IDX = 0

    # synthetic "embedding_items" (normally unpickled from disk)
    items = [
        {"embedding_name": "item_a", "vocab_size": 11, "embedding_dim": 8,
         "x_col_index": [0]},
        {"embedding_name": "item_b", "vocab_size": 19, "embedding_dim": 4,
         "x_col_index": [1, 2]},
    ]

    # deterministic embedding tables, padding_idx row zeroed (nn.Embedding semantics)
    table_a = jax.random.normal(k_a, (11, 8), jnp.float32).at[PADDING_IDX].set(0.0)
    table_b = jax.random.normal(k_b, (19, 4), jnp.float32).at[PADDING_IDX].set(0.0)
    tables = [table_a, table_b]

    # per-categorical-column metadata (column order = concat order in forward)
    cat_cols, col_tables = [], []
    for item, tbl in zip(items, tables):
        for c in item["x_col_index"]:
            cat_cols.append(c)
            col_tables.append(tbl)
    del_set = set(cat_cols)
    cont_cols = [c for c in range(F_DIM) if c not in del_set]   # ascending, like mask

    # block-diagonal combined table + per-column vocab offsets/sizes
    v_total = sum(t.shape[0] for t in col_tables)
    d_total = sum(t.shape[1] for t in col_tables)
    w_np = np.zeros((v_total, d_total), np.float32)
    vocab_offsets, vocab_sizes = [], []
    voff, doff = 0, 0
    for t in col_tables:
        v, d = t.shape
        w_np[voff:voff + v, doff:doff + d] = np.array(t)
        vocab_offsets.append(voff)
        vocab_sizes.append(v)
        voff += v
        doff += d
    w_blockdiag = jnp.asarray(w_np)

    input_size = len(cont_cols) + d_total                       # LayerNorm size
    gamma = jnp.ones((input_size,), jnp.float32)                # nn.LayerNorm defaults
    beta = jnp.zeros((input_size,), jnp.float32)

    # deterministic input: categorical columns hold integer ids, rest continuous
    x_np = np.array(jax.random.normal(k_cont, (B, SEQ, F_DIM), jnp.float32))
    ids_a = np.array(jax.random.randint(k_cat1, (B, SEQ), 0, 11))
    ids_b = np.array(jax.random.randint(k_cat2, (B, SEQ, 2), 0, 19))
    x_np[:, :, 0] = ids_a.astype(np.float32)
    x_np[:, :, 1:3] = ids_b.astype(np.float32)
    x = jnp.asarray(x_np)

    out = call_records_embeddings(x, cont_cols, cat_cols, vocab_offsets,
                                  vocab_sizes, w_blockdiag, gamma, beta)
    out = jax.block_until_ready(out)

    ref = reference(x, items, tables, gamma, beta)
    np.testing.assert_allclose(np.array(out), np.array(ref),
                               rtol=1e-4, atol=1e-4)

    print("KERNEL_OK")
</pallas_src>

<mosaic_0001>
module attributes {stable_mosaic.version = 11 : i64} {
  func.func @_embed_ln_kernel(%arg0: i32, %arg1: memref<16x8xf32, #tpu.memory_space<vmem>>, %arg2: memref<49x128xf32, #tpu.memory_space<vmem>>, %arg3: memref<8x128xf32, #tpu.memory_space<vmem>>, %arg4: memref<1x128xf32, #tpu.memory_space<vmem>>, %arg5: memref<1x128xf32, #tpu.memory_space<vmem>>, %arg6: memref<16x128xf32, #tpu.memory_space<vmem>>) attributes {dimension_semantics = [#tpu.dimension_semantics<parallel>], iteration_bounds = array<i64: 1>, scalar_prefetch = 0 : i64, scratch_operands = 0 : i64, tpu.core_type = #tpu.core_type<tc>, window_params = [{transform_indices = @transform_0, window_bounds = array<i64: 16, 8>}, {pipeline_mode = #tpu.pipeline_mode<synchronous>, transform_indices = @transform_1, window_bounds = array<i64: 49, 128>}, {pipeline_mode = #tpu.pipeline_mode<synchronous>, transform_indices = @transform_2, window_bounds = array<i64: 8, 128>}, {pipeline_mode = #tpu.pipeline_mode<synchronous>, transform_indices = @transform_3, window_bounds = array<i64: 1, 128>}, {pipeline_mode = #tpu.pipeline_mode<synchronous>, transform_indices = @transform_4, window_bounds = array<i64: 1, 128>}, {transform_indices = @transform_5, window_bounds = array<i64: 16, 128>}]} {
    %c0 = arith.constant 0 : index
    %c0_0 = arith.constant 0 : index
    %0 = vector.load %arg1[%c0, %c0_0] : memref<16x8xf32, #tpu.memory_space<vmem>>, vector<16x8xf32>
    %1 = tpu.iota {dimensions = array<i32: 1>} : vector<16x49xi32>
    %2 = vector.extract_strided_slice %0 {offsets = [0, 0], sizes = [16, 1], strides = [1, 1]} : vector<16x8xf32> to vector<16x1xf32>
    %3 = arith.fptosi %2 : vector<16x1xf32> to vector<16x1xi32>
    %c0_i32 = arith.constant 0 : i32
    %4 = vector.broadcast %c0_i32 : i32 to vector<16x1xi32>
    %5 = arith.addi %3, %4 : vector<16x1xi32>
    %6 = vector.broadcast %5 : vector<16x1xi32> to vector<16x49xi32>
    %7 = arith.cmpi eq, %1, %6 : vector<16x49xi32>
    %8 = arith.extui %7 : vector<16x49xi1> to vector<16x49xi32>
    %9 = arith.sitofp %8 : vector<16x49xi32> to vector<16x49xf32>
    %10 = vector.extract_strided_slice %0 {offsets = [0, 1], sizes = [16, 1], strides = [1, 1]} : vector<16x8xf32> to vector<16x1xf32>
    %11 = arith.fptosi %10 : vector<16x1xf32> to vector<16x1xi32>
    %c11_i32 = arith.constant 11 : i32
    %12 = vector.broadcast %c11_i32 : i32 to vector<16x1xi32>
    %13 = arith.addi %11, %12 : vector<16x1xi32>
    %14 = vector.broadcast %13 : vector<16x1xi32> to vector<16x49xi32>
    %15 = arith.cmpi eq, %1, %14 : vector<16x49xi32>
    %16 = arith.extui %15 : vector<16x49xi1> to vector<16x49xi32>
    %17 = arith.sitofp %16 : vector<16x49xi32> to vector<16x49xf32>
    %18 = arith.addf %9, %17 : vector<16x49xf32>
    %19 = vector.extract_strided_slice %0 {offsets = [0, 2], sizes = [16, 1], strides = [1, 1]} : vector<16x8xf32> to vector<16x1xf32>
    %20 = arith.fptosi %19 : vector<16x1xf32> to vector<16x1xi32>
    %c30_i32 = arith.constant 30 : i32
    %21 = vector.broadcast %c30_i32 : i32 to vector<16x1xi32>
    %22 = arith.addi %20, %21 : vector<16x1xi32>
    %23 = vector.broadcast %22 : vector<16x1xi32> to vector<16x49xi32>
    %24 = arith.cmpi eq, %1, %23 : vector<16x49xi32>
    %25 = arith.extui %24 : vector<16x49xi1> to vector<16x49xi32>
    %26 = arith.sitofp %25 : vector<16x49xi32> to vector<16x49xf32>
    %27 = arith.addf %18, %26 : vector<16x49xf32>
    %c0_1 = arith.constant 0 : index
    %c0_2 = arith.constant 0 : index
    %28 = vector.load %arg2[%c0_1, %c0_2] : memref<49x128xf32, #tpu.memory_space<vmem>>, vector<49x128xf32>
    %cst = arith.constant dense<0.000000e+00> : vector<16x128xf32>
    %29 = tpu.matmul %27, %28, %cst {dimension_numbers = #tpu.dot_dimension_numbers<[1], [0], [0], [1], [0, 0, 1, 1], [], []>} : vector<16x49xf32>, vector<49x128xf32>, vector<16x128xf32> -> vector<16x128xf32>
    %c0_3 = arith.constant 0 : index
    %c0_4 = arith.constant 0 : index
    %30 = vector.load %arg3[%c0_3, %c0_4] : memref<8x128xf32, #tpu.memory_space<vmem>>, vector<8x128xf32>
    %cst_5 = arith.constant dense<0.000000e+00> : vector<16x128xf32>
    %31 = tpu.matmul %0, %30, %cst_5 {dimension_numbers = #tpu.dot_dimension_numbers<[1], [0], [0], [1], [0, 0, 1, 1], [], []>} : vector<16x8xf32>, vector<8x128xf32>, vector<16x128xf32> -> vector<16x128xf32>
    %32 = arith.addf %29, %31 : vector<16x128xf32>
    %cst_6 = arith.constant dense<0.000000e+00> : vector<16xf32>
    %33 = vector.multi_reduction <add>, %32, %cst_6 [1] : vector<16x128xf32> to vector<16xf32>
    %34 = vector.shape_cast %33 : vector<16xf32> to vector<16x1xf32>
    %cst_7 = arith.constant 0.0476190485 : f32
    %35 = vector.broadcast %cst_7 : f32 to vector<16x1xf32>
    %36 = arith.mulf %34, %35 : vector<16x1xf32>
    %37 = vector.broadcast %36 : vector<16x1xf32> to vector<16x128xf32>
    %38 = arith.subf %32, %37 : vector<16x128xf32>
    %39 = arith.mulf %38, %38 : vector<16x128xf32>
    %cst_8 = arith.constant dense<0.000000e+00> : vector<16xf32>
    %40 = vector.multi_reduction <add>, %39, %cst_8 [1] : vector<16x128xf32> to vector<16xf32>
    %41 = vector.shape_cast %40 : vector<16xf32> to vector<16x1xf32>
    %cst_9 = arith.constant 1.070000e+02 : f32
    %42 = vector.broadcast %cst_9 : f32 to vector<16x1xf32>
    %43 = arith.mulf %42, %36 : vector<16x1xf32>
    %44 = arith.mulf %43, %36 : vector<16x1xf32>
    %45 = arith.subf %41, %44 : vector<16x1xf32>
    %cst_10 = arith.constant 0.0476190485 : f32
    %46 = vector.broadcast %cst_10 : f32 to vector<16x1xf32>
    %47 = arith.mulf %45, %46 : vector<16x1xf32>
    %cst_11 = arith.constant 0.000000e+00 : f32
    %48 = vector.broadcast %cst_11 : f32 to vector<16x1xf32>
    %49 = arith.maximumf %47, %48 : vector<16x1xf32>
    %cst_12 = arith.constant 9.99999974E-6 : f32
    %50 = vector.broadcast %cst_12 : f32 to vector<16x1xf32>
    %51 = arith.addf %49, %50 : vector<16x1xf32>
    %52 = math.rsqrt %51 : vector<16x1xf32>
    %53 = vector.broadcast %52 : vector<16x1xf32> to vector<16x128xf32>
    %54 = arith.mulf %38, %53 : vector<16x128xf32>
    %c0_13 = arith.constant 0 : index
    %c0_14 = arith.constant 0 : index
    %55 = vector.load %arg4[%c0_13, %c0_14] : memref<1x128xf32, #tpu.memory_space<vmem>>, vector<1x128xf32>
    %56 = vector.broadcast %55 : vector<1x128xf32> to vector<16x128xf32>
    %57 = arith.mulf %54, %56 : vector<16x128xf32>
    %c0_15 = arith.constant 0 : index
    %c0_16 = arith.constant 0 : index
    %58 = vector.load %arg5[%c0_15, %c0_16] : memref<1x128xf32, #tpu.memory_space<vmem>>, vector<1x128xf32>
    %59 = vector.broadcast %58 : vector<1x128xf32> to vector<16x128xf32>
    %60 = arith.addf %57, %59 : vector<16x128xf32>
    %c0_17 = arith.constant 0 : index
    %c0_18 = arith.constant 0 : index
    %61 = vector.load %arg6[%c0_17, %c0_18] : memref<16x128xf32, #tpu.memory_space<vmem>>, vector<16x128xf32>
    tpu.vector_store %arg6[%c0_17, %c0_18], %60 {strides = array<i32>} : memref<16x128xf32, #tpu.memory_space<vmem>>, vector<16x128xf32>,
    return
  }
  func.func @transform_0(%arg0: i32) -> (i32, i32) {
    %c0_i32 = arith.constant 0 : i32
    %c0_i32_0 = arith.constant 0 : i32
    return %arg0, %c0_i32 : i32, i32
  }
  func.func @transform_1(%arg0: i32) -> (i32, i32) {
    %c0_i32 = arith.constant 0 : i32
    %c0_i32_0 = arith.constant 0 : i32
    %c0_i32_1 = arith.constant 0 : i32
    return %c0_i32, %c0_i32_0 : i32, i32
  }
  func.func @transform_2(%arg0: i32) -> (i32, i32) {
    %c0_i32 = arith.constant 0 : i32
    %c0_i32_0 = arith.constant 0 : i32
    %c0_i32_1 = arith.constant 0 : i32
    return %c0_i32, %c0_i32_0 : i32, i32
  }
  func.func @transform_3(%arg0: i32) -> (i32, i32) {
    %c0_i32 = arith.constant 0 : i32
    %c0_i32_0 = arith.constant 0 : i32
    %c0_i32_1 = arith.constant 0 : i32
    return %c0_i32, %c0_i32_0 : i32, i32
  }
  func.func @transform_4(%arg0: i32) -> (i32, i32) {
    %c0_i32 = arith.constant 0 : i32
    %c0_i32_0 = arith.constant 0 : i32
    %c0_i32_1 = arith.constant 0 : i32
    return %c0_i32, %c0_i32_0 : i32, i32
  }
  func.func @transform_5(%arg0: i32) -> (i32, i32) {
    %c0_i32 = arith.constant 0 : i32
    %c0_i32_0 = arith.constant 0 : i32
    return %arg0, %c0_i32 : i32, i32
  }
}

module attributes {stable_mosaic.version = 11 : i64} {
  func.func @_embed_ln_kernel(%arg0: i32, %arg1: memref<16x8xf32, #tpu.memory_space<vmem>>, %arg2: memref<49x128xf32, #tpu.memory_space<vmem>>, %arg3: memref<8x128xf32, #tpu.memory_space<vmem>>, %arg4: memref<1x128xf32, #tpu.memory_space<vmem>>, %arg5: memref<1x128xf32, #tpu.memory_space<vmem>>, %arg6: memref<16x128xf32, #tpu.memory_space<vmem>>) attributes {dimension_semantics = [#tpu.dimension_semantics<parallel>], iteration_bounds = array<i64: 1>, scalar_prefetch = 0 : i64, scratch_operands = 0 : i64, tpu.core_type = #tpu.core_type<tc>, window_params = [{transform_indices = @transform_0, window_bounds = array<i64: 16, 8>}, {pipeline_mode = #tpu.pipeline_mode<synchronous>, transform_indices = @transform_1, window_bounds = array<i64: 49, 128>}, {pipeline_mode = #tpu.pipeline_mode<synchronous>, transform_indices = @transform_2, window_bounds = array<i64: 8, 128>}, {pipeline_mode = #tpu.pipeline_mode<synchronous>, transform_indices = @transform_3, window_bounds = array<i64: 1, 128>}, {pipeline_mode = #tpu.pipeline_mode<synchronous>, transform_indices = @transform_4, window_bounds = array<i64: 1, 128>}, {transform_indices = @transform_5, window_bounds = array<i64: 16, 128>}]} {
    %c0 = arith.constant 0 : index
    %c0_0 = arith.constant 0 : index
    %0 = vector.load %arg1[%c0, %c0_0] : memref<16x8xf32, #tpu.memory_space<vmem>>, vector<16x8xf32>
    %1 = tpu.iota {dimensions = array<i32: 1>} : vector<16x49xi32>
    %2 = vector.extract_strided_slice %0 {offsets = [0, 0], sizes = [16, 1], strides = [1, 1]} : vector<16x8xf32> to vector<16x1xf32>
    %3 = arith.fptosi %2 : vector<16x1xf32> to vector<16x1xi32>
    %c0_i32 = arith.constant 0 : i32
    %4 = vector.broadcast %c0_i32 : i32 to vector<16x1xi32>
    %5 = arith.addi %3, %4 : vector<16x1xi32>
    %6 = vector.broadcast %5 : vector<16x1xi32> to vector<16x49xi32>
    %7 = arith.cmpi eq, %1, %6 : vector<16x49xi32>
    %8 = arith.extui %7 : vector<16x49xi1> to vector<16x49xi32>
    %9 = arith.sitofp %8 : vector<16x49xi32> to vector<16x49xf32>
    %10 = vector.extract_strided_slice %0 {offsets = [0, 1], sizes = [16, 1], strides = [1, 1]} : vector<16x8xf32> to vector<16x1xf32>
    %11 = arith.fptosi %10 : vector<16x1xf32> to vector<16x1xi32>
    %c11_i32 = arith.constant 11 : i32
    %12 = vector.broadcast %c11_i32 : i32 to vector<16x1xi32>
    %13 = arith.addi %11, %12 : vector<16x1xi32>
    %14 = vector.broadcast %13 : vector<16x1xi32> to vector<16x49xi32>
    %15 = arith.cmpi eq, %1, %14 : vector<16x49xi32>
    %16 = arith.extui %15 : vector<16x49xi1> to vector<16x49xi32>
    %17 = arith.sitofp %16 : vector<16x49xi32> to vector<16x49xf32>
    %18 = arith.addf %9, %17 : vector<16x49xf32>
    %19 = vector.extract_strided_slice %0 {offsets = [0, 2], sizes = [16, 1], strides = [1, 1]} : vector<16x8xf32> to vector<16x1xf32>
    %20 = arith.fptosi %19 : vector<16x1xf32> to vector<16x1xi32>
    %c30_i32 = arith.constant 30 : i32
    %21 = vector.broadcast %c30_i32 : i32 to vector<16x1xi32>
    %22 = arith.addi %20, %21 : vector<16x1xi32>
    %23 = vector.broadcast %22 : vector<16x1xi32> to vector<16x49xi32>
    %24 = arith.cmpi eq, %1, %23 : vector<16x49xi32>
    %25 = arith.extui %24 : vector<16x49xi1> to vector<16x49xi32>
    %26 = arith.sitofp %25 : vector<16x49xi32> to vector<16x49xf32>
    %27 = arith.addf %18, %26 : vector<16x49xf32>
    %c0_1 = arith.constant 0 : index
    %c0_2 = arith.constant 0 : index
    %28 = vector.load %arg2[%c0_1, %c0_2] : memref<49x128xf32, #tpu.memory_space<vmem>>, vector<49x128xf32>
    %cst = arith.constant dense<0.000000e+00> : vector<16x128xf32>
    %29 = tpu.matmul %27, %28, %cst {dimension_numbers = #tpu.dot_dimension_numbers<[1], [0], [0], [1], [0, 0, 1, 1], [], []>} : vector<16x49xf32>, vector<49x128xf32>, vector<16x128xf32> -> vector<16x128xf32>
    %c0_3 = arith.constant 0 : index
    %c0_4 = arith.constant 0 : index
    %30 = vector.load %arg3[%c0_3, %c0_4] : memref<8x128xf32, #tpu.memory_space<vmem>>, vector<8x128xf32>
    %cst_5 = arith.constant dense<0.000000e+00> : vector<16x128xf32>
    %31 = tpu.matmul %0, %30, %cst_5 {dimension_numbers = #tpu.dot_dimension_numbers<[1], [0], [0], [1], [0, 0, 1, 1], [], []>} : vector<16x8xf32>, vector<8x128xf32>, vector<16x128xf32> -> vector<16x128xf32>
    %32 = arith.addf %29, %31 : vector<16x128xf32>
    %cst_6 = arith.constant dense<0.000000e+00> : vector<16xf32>
    %33 = vector.multi_reduction <add>, %32, %cst_6 [1] : vector<16x128xf32> to vector<16xf32>
    %34 = vector.shape_cast %33 : vector<16xf32> to vector<16x1xf32>
    %cst_7 = arith.constant 0.0476190485 : f32
    %35 = vector.broadcast %cst_7 : f32 to vector<16x1xf32>
    %36 = arith.mulf %34, %35 : vector<16x1xf32>
    %37 = vector.broadcast %36 : vector<16x1xf32> to vector<16x128xf32>
    %38 = arith.subf %32, %37 : vector<16x128xf32>
    %39 = arith.mulf %38, %38 : vector<16x128xf32>
    %cst_8 = arith.constant dense<0.000000e+00> : vector<16xf32>
    %40 = vector.multi_reduction <add>, %39, %cst_8 [1] : vector<16x128xf32> to vector<16xf32>
    %41 = vector.shape_cast %40 : vector<16xf32> to vector<16x1xf32>
    %cst_9 = arith.constant 1.070000e+02 : f32
    %42 = vector.broadcast %cst_9 : f32 to vector<16x1xf32>
    %43 = arith.mulf %42, %36 : vector<16x1xf32>
    %44 = arith.mulf %43, %36 : vector<16x1xf32>
    %45 = arith.subf %41, %44 : vector<16x1xf32>
    %cst_10 = arith.constant 0.0476190485 : f32
    %46 = vector.broadcast %cst_10 : f32 to vector<16x1xf32>
    %47 = arith.mulf %45, %46 : vector<16x1xf32>
    %cst_11 = arith.constant 0.000000e+00 : f32
    %48 = vector.broadcast %cst_11 : f32 to vector<16x1xf32>
    %49 = arith.maximumf %47, %48 : vector<16x1xf32>
    %cst_12 = arith.constant 9.99999974E-6 : f32
    %50 = vector.broadcast %cst_12 : f32 to vector<16x1xf32>
    %51 = arith.addf %49, %50 : vector<16x1xf32>
    %52 = math.rsqrt %51 : vector<16x1xf32>
    %53 = vector.broadcast %52 : vector<16x1xf32> to vector<16x128xf32>
    %54 = arith.mulf %38, %53 : vector<16x128xf32>
    %c0_13 = arith.constant 0 : index
    %c0_14 = arith.constant 0 : index
    %55 = vector.load %arg4[%c0_13, %c0_14] : memref<1x128xf32, #tpu.memory_space<vmem>>, vector<1x128xf32>
    %56 = vector.broadcast %55 : vector<1x128xf32> to vector<16x128xf32>
    %57 = arith.mulf %54, %56 : vector<16x128xf32>
    %c0_15 = arith.constant 0 : index
    %c0_16 = arith.constant 0 : index
    %58 = vector.load %arg5[%c0_15, %c0_16] : memref<1x128xf32, #tpu.memory_space<vmem>>, vector<1x128xf32>
    %59 = vector.broadcast %58 : vector<1x128xf32> to vector<16x128xf32>
    %60 = arith.addf %57, %59 : vector<16x128xf32>
    %c0_17 = arith.constant 0 : index
    %c0_18 = arith.constant 0 : index
    %61 = vector.load %arg6[%c0_17, %c0_18] : memref<16x128xf32, #tpu.memory_space<vmem>>, vector<16x128xf32>
    tpu.vector_store %arg6[%c0_17, %c0_18], %60 {strides = array<i32>} : memref<16x128xf32, #tpu.memory_space<vmem>>, vector<16x128xf32>,
    return
  }
  func.func @transform_0(%arg0: i32) -> (i32, i32) {
    %c0_i32 = arith.constant 0 : i32
    %c0_i32_0 = arith.constant 0 : i32
    return %arg0, %c0_i32 : i32, i32
  }
  func.func @transform_1(%arg0: i32) -> (i32, i32) {
    %c0_i32 = arith.constant 0 : i32
    %c0_i32_0 = arith.constant 0 : i32
    %c0_i32_1 = arith.constant 0 : i32
    return %c0_i32, %c0_i32_0 : i32, i32
  }
  func.func @transform_2(%arg0: i32) -> (i32, i32) {
    %c0_i32 = arith.constant 0 : i32
    %c0_i32_0 = arith.constant 0 : i32
    %c0_i32_1 = arith.constant 0 : i32
    return %c0_i32, %c0_i32_0 : i32, i32
  }
  func.func @transform_3(%arg0: i32) -> (i32, i32) {
    %c0_i32 = arith.constant 0 : i32
    %c0_i32_0 = arith.constant 0 : i32
    %c0_i32_1 = arith.constant 0 : i32
    return %c0_i32, %c0_i32_0 : i32, i32
  }
  func.func @transform_4(%arg0: i32) -> (i32, i32) {
    %c0_i32 = arith.constant 0 : i32
    %c0_i32_0 = arith.constant 0 : i32
    %c0_i32_1 = arith.constant 0 : i32
    return %c0_i32, %c0_i32_0 : i32, i32
  }
  func.func @transform_5(%arg0: i32) -> (i32, i32) {
    %c0_i32 = arith.constant 0 : i32
    %c0_i32_0 = arith.constant 0 : i32
    return %arg0, %c0_i32 : i32, i32
  }
}

</mosaic_0001>

<llo_original>
// kernel: tpu_custom_call.1
$region0: #{tpu_custom_call.1}
  #allocation0 [shape = 'u32[]', space=smem, size = 0x4, offset = 0x4, fixed_abs, tag = 'smem constant byte address 0x4 - core index']
  #allocation1 [shape = 'u32[144,128]{1,0:T(1,128)}', space=vmem, size = 0x12000, scoped, tag = 'internal scratch']
  %s0 = inlined_call_operand.vmem [shape: f32[16,8], index: 0, kind: input, shape index: {}]
  %s1 = inlined_call_operand.hbm [shape: f32[49,128], index: 1, kind: input, shape index: {}]
  %s2 = inlined_call_operand.vmem [shape: f32[8,128], index: 2, kind: input, shape index: {}]
  %s3 = inlined_call_operand.vmem [shape: f32[1,128], index: 3, kind: input, shape index: {}]
  %s4 = inlined_call_operand.vmem [shape: f32[1,128], index: 4, kind: input, shape index: {}]
  %s5 = inlined_call_operand.hbm [shape: f32[16,128], index: 5, kind: output, shape index: {}]
  %s6 = sld [smem:[#allocation0]]
  $region34: #{tpu_custom_call.1} parent=0
    _
  %s8 = ssub.s32 1, %s6
  %s9 = scalar_select 0, %s8, %s6
  $region1: #{tpu_custom_call.1} parent=0
    #allocation2 [shape = 'u8[28672]{0}', space=vmem, size = 0x7000, scoped, tag = 'input window, operand 1, single buffered']
    #allocation3 [shape = 's32[1]{0}', space=sflag, size = 0x4, scoped, tag = 'scoped memory for tpu_custom_call.1']
    #allocation4 [shape = 's32[1]{0}', space=sflag, size = 0x4, scoped, tag = 'scoped memory for tpu_custom_call.1']
    #allocation5 [shape = 'u8[8192]{0}', space=vmem, size = 0x2000, scoped, tag = 'output window, operand 0, single buffered']
    %10 = vsyncpa [#allocation3], 0
    %11 = vsyncpa [#allocation4], 0
    // Predicated region
    $region2: #{tpu_custom_call.1} parent=1 // pred_check
      _
    $region3: #{tpu_custom_call.1} parent=1 // pred_check_branch
      %13 = sbr.rel (0) target = $region5
    $region4: #{tpu_custom_call.1} parent=1 // pred_region
      _
    $region5: #{tpu_custom_call.1} parent=1 // pred_fallthru
      _
    // Predicated region
    $region6: #{tpu_custom_call.1} parent=1 // pred_check
      _
    $region7: #{tpu_custom_call.1} parent=1 // pred_check_branch
      %15 = sbr.rel (0) target = $region9
    $region8: #{tpu_custom_call.1} parent=1 // pred_region
      %s17 = ssub.s32 896, 896
      %18 = vsyncadd [#allocation3], %s17
      %s19 = sshll.u32 [#allocation2], 4
      %s20 = int_to_ptr.vmem [resolvable:$true] %s19
      %25 = dma.hbm_to_vmem [thread:$0]  %s1, 896, %s20, [#allocation3], 128, 128, 8
    $region9: #{tpu_custom_call.1} parent=1 // pred_fallthru
      _
    // Predicated region
    $region10: #{tpu_custom_call.1} parent=1 // pred_check
      _
    $region11: #{tpu_custom_call.1} parent=1 // pred_check_branch
      %27 = sbr.rel (0) target = $region13
    $region12: #{tpu_custom_call.1} parent=1 // pred_region
      _
    $region13: #{tpu_custom_call.1} parent=1 // pred_fallthru
      _
    // Predicated region
    $region14: #{tpu_custom_call.1} parent=1 // pred_check
      _
    $region15: #{tpu_custom_call.1} parent=1 // pred_check_branch
      %29 = sbr.rel (0) target = $region17
    $region16: #{tpu_custom_call.1} parent=1 // pred_region
      _
    $region17: #{tpu_custom_call.1} parent=1 // pred_fallthru
      _
    // Predicated region
    $region18: #{tpu_custom_call.1} parent=1 // pred_check
      _
    $region19: #{tpu_custom_call.1} parent=1 // pred_check_branch
      %31 = sbr.rel (0) target = $region21
    $region20: #{tpu_custom_call.1} parent=1 // pred_region
      _
    $region21: #{tpu_custom_call.1} parent=1 // pred_fallthru
      _
    // Predicated region
    $region22: #{tpu_custom_call.1} parent=1 // pred_check
      _
    $region23: #{tpu_custom_call.1} parent=1 // pred_check_branch
      %33 = sbr.rel (0) target = $region25
    $region24: #{tpu_custom_call.1} parent=1 // pred_region
      %34 = dma.done [#allocation3], 896
    $region25: #{tpu_custom_call.1} parent=1 // pred_fallthru
      _
    %v35 = vld [vmem:[%s0] sm:$0xff]
    %v36 = vld [vmem:[%s0 + $0x8] sm:$0xff]
    %v37 = vlaneseq
    %v38 = vand.u32 %v37, 127
    %v39 = vcvt.f32.s32.to.zero.pseudo %v35
    %v40 = vcvt.f32.s32.to.zero.pseudo %v36
    %41 = vset.pattern.permute.xlu0 0
    %42 = vperm.xlu0 %41, %v39
    %v43 = vpop.permute.xlu0 %42
    %44 = vset.pattern.permute.xlu0 0
    %45 = vperm.xlu0 %44, %v40
    %v46 = vpop.permute.xlu0 %45
    %vm47 = vcmp.eq.s32.totalorder %v38, %v43
    %vm48 = vcmp.eq.s32.totalorder %v38, %v46
    %v49 = vsel %vm47, 1, 0
    %v50 = vsel %vm48, 1, 0
    %v51 = vcvt.s32.f32 %v49
    %v52 = vcvt.s32.f32 %v50
    %v53 = vadd.s32 %v39, 11
    %v54 = vadd.s32 %v40, 11
    %55 = vset.pattern.permute.xlu0 1
    %56 = vperm.xlu0 %55, %v53
    %v57 = vpop.permute.xlu0 %56
    %58 = vset.pattern.permute.xlu0 1
    %59 = vperm.xlu0 %58, %v54
    %v60 = vpop.permute.xlu0 %59
    %vm61 = vcmp.eq.s32.totalorder %v38, %v57
    %vm62 = vcmp.eq.s32.totalorder %v38, %v60
    %v63 = vsel %vm61, 1, 0
    %v64 = vsel %vm62, 1, 0
    %v65 = vcvt.s32.f32 %v63
    %v66 = vcvt.s32.f32 %v64
    %v67 = vadd.f32 %v51, %v65
    %v68 = vadd.f32 %v52, %v66
    %v69 = vadd.s32 %v39, 30
    %v70 = vadd.s32 %v40, 30
    %71 = vset.pattern.permute.xlu0 2
    %72 = vperm.xlu0 %71, %v69
    %v73 = vpop.permute.xlu0 %72
    %74 = vset.pattern.permute.xlu0 2
    %75 = vperm.xlu0 %74, %v70
    %v76 = vpop.permute.xlu0 %75
    %vm77 = vcmp.eq.s32.totalorder %v38, %v73
    %vm78 = vcmp.eq.s32.totalorder %v38, %v76
    %v79 = vsel %vm77, 1, 0
    %v80 = vsel %vm78, 1, 0
    %v81 = vcvt.s32.f32 %v79
    %v82 = vcvt.s32.f32 %v80
    %v83 = vadd.f32 %v67, %v81
    %v84 = vadd.f32 %v68, %v82
    %v85 = vld [vmem:[#allocation2] sm:$0xff]
    %v86 = vld [vmem:[#allocation2 + $0x8] sm:$0xff]
    %v87 = vld [vmem:[#allocation2 + $0x10] sm:$0xff]
    %v88 = vld [vmem:[#allocation2 + $0x18] sm:$0xff]
    %v89 = vld [vmem:[#allocation2 + $0x20] sm:$0xff]
    %v90 = vld [vmem:[#allocation2 + $0x28] sm:$0xff]
    %v91 = vld [vmem:[#allocation2 + $0x30] sm:$0x1]
    %v92 = vld [vmem:[%s2] sm:$0xff]
    %vm93 = vcmask 64512
    %v95 = vsel %vm93, %v35, 0
    %v98 = vsel %vm93, %v36, 0
    %100 = vmatprep.subr.mxu0 0.0
    %101 = vmatpush1.msra.mxu0 %v92
    %102 = vmatprep.subr.mxu0 0.0
    %103 = vmatpush1.msra.mxu0 0.0
    %104 = vmatprep.subr.mxu0 0.0
    %105 = vmatpush1.msra.mxu0 0.0
    %106 = vmatprep.subr.mxu0 0.0
    %107 = vmatpush1.msra.mxu0 0.0
    %108 = vmatprep.subr.mxu0 0.0
    %109 = vmatpush1.msra.mxu0 0.0
    %110 = vmatprep.subr.mxu0 0.0
    %111 = vmatpush1.msra.mxu0 0.0
    %112 = vmatprep.subr.mxu0 0.0
    %113 = vmatpush1.msra.mxu0 0.0
    %114 = vmatprep.subr.mxu0 0.0
    %115 = vmatpush1.msra.mxu0 0.0
    %116 = vmatprep.subr.mxu0 0.0
    %117 = vmatpush1.msra.mxu0 0.0
    %118 = vmatprep.subr.mxu0 0.0
    %119 = vmatpush1.msra.mxu0 0.0
    %120 = vmatprep.subr.mxu0 0.0
    %121 = vmatpush1.msra.mxu0 0.0
    %122 = vmatprep.subr.mxu0 0.0
    %123 = vmatpush1.msra.mxu0 0.0
    %124 = vmatprep.subr.mxu0 0.0
    %125 = vmatpush1.msra.mxu0 0.0
    %126 = vmatprep.subr.mxu0 0.0
    %127 = vmatpush1.msra.mxu0 0.0
    %128 = vmatprep.subr.mxu0 0.0
    %129 = vmatpush1.msra.mxu0 0.0
    %130 = vmatprep.subr.mxu0 0.0
    %131 = vmatpush1.msra.mxu0 0.0
    %132 = vmatprep.subr.mxu0 0.0
    %133 = vmatpush1.msra.mxu0 0.0
    %134 = vmatprep.subr.mxu0 0.0
    %135 = vmatpush1.msra.mxu0 0.0
    %136 = vmatprep.subr.mxu0 0.0
    %137 = vmatpush1.msra.mxu0 0.0
    %138 = vmatprep.subr.mxu0 0.0
    %139 = vmatpush1.msra.mxu0 0.0
    %140 = vmatprep.subr.mxu0 0.0
    %141 = vmatpush1.msra.mxu0 0.0
    %142 = vmatprep.subr.mxu0 0.0
    %143 = vmatpush1.msra.mxu0 0.0
    %144 = vmatprep.subr.mxu0 0.0
    %145 = vmatpush1.msra.mxu0 0.0
    %146 = vmatprep.subr.mxu0 0.0
    %147 = vmatpush1.msra.mxu0 0.0
    %148 = vmatprep.subr.mxu0 0.0
    %149 = vmatpush1.msra.mxu0 0.0
    %150 = vmatprep.subr.mxu0 0.0
    %151 = vmatpush1.msra.mxu0 0.0
    %152 = vmatprep.subr.mxu0 0.0
    %153 = vmatpush1.msra.mxu0 0.0
    %154 = vmatprep.subr.mxu0 0.0
    %155 = vmatpush1.msra.mxu0 0.0
    %156 = vmatprep.subr.mxu0 0.0
    %157 = vmatpush1.msra.mxu0 0.0
    %158 = vmatprep.subr.mxu0 0.0
    %159 = vmatpush1.msra.mxu0 0.0
    %160 = vmatprep.subr.mxu0 0.0
    %161 = vmatpush1.msra.mxu0 0.0
    %162 = vmatprep.subr.mxu0 0.0
    %163 = vmatpush1.msra.mxu0 0.0
    %164 = vmatprep.mubr.f32.mxu0 0.0
    %165 = vmatmul.mubr.f32.gmra.mrb[0].mxu0 %v95
    %v166 = vpop.f32.mrb[0].mxu0
    %v167 = vadd.f32 0.0, %v166
    %v168 = vpop.f32.mrb[0].mxu0
    %169 = vmatprep.mubr.f32.mxu0 0.0
    %170 = vmatmul.mubr.f32.gmra.mrb[0].mxu0 %v98
    %v171 = vpop.f32.mrb[0].mxu0
    %v172 = vadd.f32 0.0, %v171
    %v173 = vpop.f32.mrb[0].mxu0
    %174 = vdwg.mxu0
    %vm175 = vcmask 400384
    %v177 = vsel %vm175, %v83, 0
    %v180 = vsel %vm175, %v84, 0
    %vm182 = vcmask 1040384
    %v184 = vsel %vm182, %v91, 0
    %186 = vmatprep.subr.mxu0 0.0
    %187 = vmatpush1.msra.mxu0 %v85
    %188 = vmatprep.subr.mxu0 0.0
    %189 = vmatpush1.msra.mxu0 %v86
    %190 = vmatprep.subr.mxu0 0.0
    %191 = vmatpush1.msra.mxu0 %v87
    %192 = vmatprep.subr.mxu0 0.0
    %193 = vmatpush1.msra.mxu0 %v88
    %194 = vmatprep.subr.mxu0 0.0
    %195 = vmatpush1.msra.mxu0 %v89
    %196 = vmatprep.subr.mxu0 0.0
    %197 = vmatpush1.msra.mxu0 %v90
    %198 = vmatprep.subr.mxu0 0.0
    %199 = vmatpush1.msra.mxu0 %v184
    %200 = vmatprep.subr.mxu0 0.0
    %201 = vmatpush1.msra.mxu0 0.0
    %202 = vmatprep.subr.mxu0 0.0
    %203 = vmatpush1.msra.mxu0 0.0
    %204 = vmatprep.subr.mxu0 0.0
    %205 = vmatpush1.msra.mxu0 0.0
    %206 = vmatprep.subr.mxu0 0.0
    %207 = vmatpush1.msra.mxu0 0.0
    %208 = vmatprep.subr.mxu0 0.0
    %209 = vmatpush1.msra.mxu0 0.0
    %210 = vmatprep.subr.mxu0 0.0
    %211 = vmatpush1.msra.mxu0 0.0
    %212 = vmatprep.subr.mxu0 0.0
    %213 = vmatpush1.msra.mxu0 0.0
    %214 = vmatprep.subr.mxu0 0.0
    %215 = vmatpush1.msra.mxu0 0.0
    %216 = vmatprep.subr.mxu0 0.0
    %217 = vmatpush1.msra.mxu0 0.0
    %218 = vmatprep.subr.mxu0 0.0
    %219 = vmatpush1.msra.mxu0 0.0
    %220 = vmatprep.subr.mxu0 0.0
    %221 = vmatpush1.msra.mxu0 0.0
    %222 = vmatprep.subr.mxu0 0.0
    %223 = vmatpush1.msra.mxu0 0.0
    %224 = vmatprep.subr.mxu0 0.0
    %225 = vmatpush1.msra.mxu0 0.0
    %226 = vmatprep.subr.mxu0 0.0
    %227 = vmatpush1.msra.mxu0 0.0
    %228 = vmatprep.subr.mxu0 0.0
    %229 = vmatpush1.msra.mxu0 0.0
    %230 = vmatprep.subr.mxu0 0.0
    %231 = vmatpush1.msra.mxu0 0.0
    %232 = vmatprep.subr.mxu0 0.0
    %233 = vmatpush1.msra.mxu0 0.0
    %234 = vmatprep.subr.mxu0 0.0
    %235 = vmatpush1.msra.mxu0 0.0
    %236 = vmatprep.subr.mxu0 0.0
    %237 = vmatpush1.msra.mxu0 0.0
    %238 = vmatprep.subr.mxu0 0.0
    %239 = vmatpush1.msra.mxu0 0.0
    %240 = vmatprep.subr.mxu0 0.0
    %241 = vmatpush1.msra.mxu0 0.0
    %242 = vmatprep.subr.mxu0 0.0
    %243 = vmatpush1.msra.mxu0 0.0
    %244 = vmatprep.subr.mxu0 0.0
    %245 = vmatpush1.msra.mxu0 0.0
    %246 = vmatprep.subr.mxu0 0.0
    %247 = vmatpush1.msra.mxu0 0.0
    %248 = vmatprep.subr.mxu0 0.0
    %249 = vmatpush1.msra.mxu0 0.0
    %250 = vmatprep.mubr.f32.mxu0 0.0
    %251 = vmatmul.mubr.f32.gmra.mrb[0].mxu0 %v177
    %v252 = vpop.f32.mrb[0].mxu0
    %v253 = vadd.f32 %v167, %v252
    %v254 = vpop.f32.mrb[0].mxu0
    %255 = vmatprep.mubr.f32.mxu0 0.0
    %256 = vmatmul.mubr.f32.gmra.mrb[0].mxu0 %v180
    %v257 = vpop.f32.mrb[0].mxu0
    %v258 = vadd.f32 %v172, %v257
    %v259 = vpop.f32.mrb[0].mxu0
    %260 = vdwg.mxu0
    %261 = vadd.xlane.f32.xlu0 %v253
    %v262 = vpop.xlane.xlu0 %261
    %263 = vadd.xlane.f32.xlu0 %v258
    %v264 = vpop.xlane.xlu0 %263
    %v265 = vmul.f32 %v262, 0.04761905
    %v266 = vmul.f32 %v264, 0.04761905
    %v267 = vsub.f32 %v253, %v265
    %v268 = vsub.f32 %v258, %v266
    %v269 = vmul.f32 %v267, %v267
    %v270 = vmul.f32 %v268, %v268
    %271 = vadd.xlane.f32.xlu0 %v269
    %v272 = vpop.xlane.xlu0 %271
    %273 = vadd.xlane.f32.xlu0 %v270
    %v274 = vpop.xlane.xlu0 %273
    %v275 = vmul.f32 %v265, 107.0
    %v276 = vmul.f32 %v266, 107.0
    %v277 = vmul.f32 %v275, %v265
    %v278 = vmul.f32 %v276, %v266
    %v279 = vsub.f32 %v272, %v277
    %v280 = vsub.f32 %v274, %v278
    %v281 = vmul.f32 %v279, 0.04761905
    %v282 = vmul.f32 %v280, 0.04761905
    %v283 = vmax.f32 %v281, 0.0
    %v284 = vmax.f32 %v282, 0.0
    %v285 = vadd.f32 %v283, 1e-05
    %v286 = vadd.f32 %v284, 1e-05
    %v287 = vrsqrt.pop %v285
    %v288 = vrsqrt.pop %v286
    %v289 = vmul.f32 %v267, %v287
    %v290 = vmul.f32 %v268, %v288
    %v291 = vld [vmem:[%s3] sm:$0x1]
    %v293 = vlaneseq
    %v294 = vshrl.u32 %v293, 7
    %v295 = vsub.s32 0, %v294
    %v296 = vrot.slane %v291, %v295
    %v298 = vmul.f32 %v289, %v296
    %v299 = vmul.f32 %v290, %v296
    %v300 = vld [vmem:[%s4] sm:$0x1]
    %v302 = vlaneseq
    %v303 = vshrl.u32 %v302, 7
    %v304 = vsub.s32 0, %v303
    %v305 = vrot.slane %v300, %v304
    %v307 = vadd.f32 %v298, %v305
    %v308 = vadd.f32 %v299, %v305
    %309 = vst [vmem:[#allocation5] sm:$0xff] %v307
    %310 = vst [vmem:[#allocation5 + $0x8] sm:$0xff] %v308
    // Predicated region
    $region26: #{tpu_custom_call.1} parent=1 // pred_check
      _
    $region27: #{tpu_custom_call.1} parent=1 // pred_check_branch
      %312 = sbr.rel (0) target = $region29
    $region28: #{tpu_custom_call.1} parent=1 // pred_region
      %s314 = ssub.s32 256, 256
      %315 = vsyncadd [#allocation4], %s314
      %s316 = sshll.u32 [#allocation5], 4
      %s317 = int_to_ptr.vmem [resolvable:$true] %s316
      %322 = dma.vmem_to_hbm [thread:$0]  %s317, 256, %s5, [#allocation4], 128, 128, 8
    $region29: #{tpu_custom_call.1} parent=1 // pred_fallthru
      _
    // Predicated region
    $region30: #{tpu_custom_call.1} parent=1 // pred_check
      _
    $region31: #{tpu_custom_call.1} parent=1 // pred_check_branch
      %324 = sbr.rel (0) target = $region33
    $region32: #{tpu_custom_call.1} parent=1 // pred_region
      %325 = dma.done [#allocation4], 256
    $region33: #{tpu_custom_call.1} parent=1 // pred_fallthru
      _
    %326 = vsyncpa [#allocation3], 1
    %327 = vsyncpa [#allocation4], 1

// kernel: tpu_custom_call.1
$region0: #{tpu_custom_call.1}
  #allocation0 [shape = 'u32[]', space=smem, size = 0x4, offset = 0x4, fixed_abs, tag = 'smem constant byte address 0x4 - core index']
  #allocation1 [shape = 'u32[144,128]{1,0:T(1,128)}', space=vmem, size = 0x12000, scoped, tag = 'internal scratch']
  %s0 = inlined_call_operand.vmem [shape: f32[16,8], index: 0, kind: input, shape index: {}]
  %s1 = inlined_call_operand.hbm [shape: f32[49,128], index: 1, kind: input, shape index: {}]
  %s2 = inlined_call_operand.vmem [shape: f32[8,128], index: 2, kind: input, shape index: {}]
  %s3 = inlined_call_operand.vmem [shape: f32[1,128], index: 3, kind: input, shape index: {}]
  %s4 = inlined_call_operand.vmem [shape: f32[1,128], index: 4, kind: input, shape index: {}]
  %s5 = inlined_call_operand.hbm [shape: f32[16,128], index: 5, kind: output, shape index: {}]
  %s6 = sld [smem:[#allocation0]]
  $region34: #{tpu_custom_call.1} parent=0
    _
  %s8 = ssub.s32 1, %s6
  %s9 = scalar_select 0, %s8, %s6
  $region1: #{tpu_custom_call.1} parent=0
    #allocation2 [shape = 'u8[28672]{0}', space=vmem, size = 0x7000, scoped, tag = 'input window, operand 1, single buffered']
    #allocation3 [shape = 's32[1]{0}', space=sflag, size = 0x4, scoped, tag = 'scoped memory for tpu_custom_call.1']
    #allocation4 [shape = 's32[1]{0}', space=sflag, size = 0x4, scoped, tag = 'scoped memory for tpu_custom_call.1']
    #allocation5 [shape = 'u8[8192]{0}', space=vmem, size = 0x2000, scoped, tag = 'output window, operand 0, single buffered']
    %10 = vsyncpa [#allocation3], 0
    %11 = vsyncpa [#allocation4], 0
    // Predicated region
    $region2: #{tpu_custom_call.1} parent=1 // pred_check
      _
    $region3: #{tpu_custom_call.1} parent=1 // pred_check_branch
      %13 = sbr.rel (0) target = $region5
    $region4: #{tpu_custom_call.1} parent=1 // pred_region
      _
    $region5: #{tpu_custom_call.1} parent=1 // pred_fallthru
      _
    // Predicated region
    $region6: #{tpu_custom_call.1} parent=1 // pred_check
      _
    $region7: #{tpu_custom_call.1} parent=1 // pred_check_branch
      %15 = sbr.rel (0) target = $region9
    $region8: #{tpu_custom_call.1} parent=1 // pred_region
      %s17 = ssub.s32 896, 896
      %18 = vsyncadd [#allocation3], %s17
      %s19 = sshll.u32 [#allocation2], 4
      %s20 = int_to_ptr.vmem [resolvable:$true] %s19
      %25 = dma.hbm_to_vmem [thread:$0]  %s1, 896, %s20, [#allocation3], 128, 128, 8
    $region9: #{tpu_custom_call.1} parent=1 // pred_fallthru
      _
    // Predicated region
    $region10: #{tpu_custom_call.1} parent=1 // pred_check
      _
    $region11: #{tpu_custom_call.1} parent=1 // pred_check_branch
      %27 = sbr.rel (0) target = $region13
    $region12: #{tpu_custom_call.1} parent=1 // pred_region
      _
    $region13: #{tpu_custom_call.1} parent=1 // pred_fallthru
      _
    // Predicated region
    $region14: #{tpu_custom_call.1} parent=1 // pred_check
      _
    $region15: #{tpu_custom_call.1} parent=1 // pred_check_branch
      %29 = sbr.rel (0) target = $region17
    $region16: #{tpu_custom_call.1} parent=1 // pred_region
      _
    $region17: #{tpu_custom_call.1} parent=1 // pred_fallthru
      _
    // Predicated region
    $region18: #{tpu_custom_call.1} parent=1 // pred_check
      _
    $region19: #{tpu_custom_call.1} parent=1 // pred_check_branch
      %31 = sbr.rel (0) target = $region21
    $region20: #{tpu_custom_call.1} parent=1 // pred_region
      _
    $region21: #{tpu_custom_call.1} parent=1 // pred_fallthru
      _
    // Predicated region
    $region22: #{tpu_custom_call.1} parent=1 // pred_check
      _
    $region23: #{tpu_custom_call.1} parent=1 // pred_check_branch
      %33 = sbr.rel (0) target = $region25
    $region24: #{tpu_custom_call.1} parent=1 // pred_region
      %34 = dma.done [#allocation3], 896
    $region25: #{tpu_custom_call.1} parent=1 // pred_fallthru
      _
    %v35 = vld [vmem:[%s0] sm:$0xff]
    %v36 = vld [vmem:[%s0 + $0x8] sm:$0xff]
    %v37 = vlaneseq
    %v38 = vand.u32 %v37, 127
    %v39 = vcvt.f32.s32.to.zero.pseudo %v35
    %v40 = vcvt.f32.s32.to.zero.pseudo %v36
    %41 = vset.pattern.permute.xlu0 0
    %42 = vperm.xlu0 %41, %v39
    %v43 = vpop.permute.xlu0 %42
    %44 = vset.pattern.permute.xlu0 0
    %45 = vperm.xlu0 %44, %v40
    %v46 = vpop.permute.xlu0 %45
    %vm47 = vcmp.eq.s32.totalorder %v38, %v43
    %vm48 = vcmp.eq.s32.totalorder %v38, %v46
    %v49 = vsel %vm47, 1, 0
    %v50 = vsel %vm48, 1, 0
    %v51 = vcvt.s32.f32 %v49
    %v52 = vcvt.s32.f32 %v50
    %v53 = vadd.s32 %v39, 11
    %v54 = vadd.s32 %v40, 11
    %55 = vset.pattern.permute.xlu0 1
    %56 = vperm.xlu0 %55, %v53
    %v57 = vpop.permute.xlu0 %56
    %58 = vset.pattern.permute.xlu0 1
    %59 = vperm.xlu0 %58, %v54
    %v60 = vpop.permute.xlu0 %59
    %vm61 = vcmp.eq.s32.totalorder %v38, %v57
    %vm62 = vcmp.eq.s32.totalorder %v38, %v60
    %v63 = vsel %vm61, 1, 0
    %v64 = vsel %vm62, 1, 0
    %v65 = vcvt.s32.f32 %v63
    %v66 = vcvt.s32.f32 %v64
    %v67 = vadd.f32 %v51, %v65
    %v68 = vadd.f32 %v52, %v66
    %v69 = vadd.s32 %v39, 30
    %v70 = vadd.s32 %v40, 30
    %71 = vset.pattern.permute.xlu0 2
    %72 = vperm.xlu0 %71, %v69
    %v73 = vpop.permute.xlu0 %72
    %74 = vset.pattern.permute.xlu0 2
    %75 = vperm.xlu0 %74, %v70
    %v76 = vpop.permute.xlu0 %75
    %vm77 = vcmp.eq.s32.totalorder %v38, %v73
    %vm78 = vcmp.eq.s32.totalorder %v38, %v76
    %v79 = vsel %vm77, 1, 0
    %v80 = vsel %vm78, 1, 0
    %v81 = vcvt.s32.f32 %v79
    %v82 = vcvt.s32.f32 %v80
    %v83 = vadd.f32 %v67, %v81
    %v84 = vadd.f32 %v68, %v82
    %v85 = vld [vmem:[#allocation2] sm:$0xff]
    %v86 = vld [vmem:[#allocation2 + $0x8] sm:$0xff]
    %v87 = vld [vmem:[#allocation2 + $0x10] sm:$0xff]
    %v88 = vld [vmem:[#allocation2 + $0x18] sm:$0xff]
    %v89 = vld [vmem:[#allocation2 + $0x20] sm:$0xff]
    %v90 = vld [vmem:[#allocation2 + $0x28] sm:$0xff]
    %v91 = vld [vmem:[#allocation2 + $0x30] sm:$0x1]
    %v92 = vld [vmem:[%s2] sm:$0xff]
    %vm93 = vcmask 64512
    %v95 = vsel %vm93, %v35, 0
    %v98 = vsel %vm93, %v36, 0
    %100 = vmatprep.subr.mxu0 0.0
    %101 = vmatpush1.msra.mxu0 %v92
    %102 = vmatprep.subr.mxu0 0.0
    %103 = vmatpush1.msra.mxu0 0.0
    %104 = vmatprep.subr.mxu0 0.0
    %105 = vmatpush1.msra.mxu0 0.0
    %106 = vmatprep.subr.mxu0 0.0
    %107 = vmatpush1.msra.mxu0 0.0
    %108 = vmatprep.subr.mxu0 0.0
    %109 = vmatpush1.msra.mxu0 0.0
    %110 = vmatprep.subr.mxu0 0.0
    %111 = vmatpush1.msra.mxu0 0.0
    %112 = vmatprep.subr.mxu0 0.0
    %113 = vmatpush1.msra.mxu0 0.0
    %114 = vmatprep.subr.mxu0 0.0
    %115 = vmatpush1.msra.mxu0 0.0
    %116 = vmatprep.subr.mxu0 0.0
    %117 = vmatpush1.msra.mxu0 0.0
    %118 = vmatprep.subr.mxu0 0.0
    %119 = vmatpush1.msra.mxu0 0.0
    %120 = vmatprep.subr.mxu0 0.0
    %121 = vmatpush1.msra.mxu0 0.0
    %122 = vmatprep.subr.mxu0 0.0
    %123 = vmatpush1.msra.mxu0 0.0
    %124 = vmatprep.subr.mxu0 0.0
    %125 = vmatpush1.msra.mxu0 0.0
    %126 = vmatprep.subr.mxu0 0.0
    %127 = vmatpush1.msra.mxu0 0.0
    %128 = vmatprep.subr.mxu0 0.0
    %129 = vmatpush1.msra.mxu0 0.0
    %130 = vmatprep.subr.mxu0 0.0
    %131 = vmatpush1.msra.mxu0 0.0
    %132 = vmatprep.subr.mxu0 0.0
    %133 = vmatpush1.msra.mxu0 0.0
    %134 = vmatprep.subr.mxu0 0.0
    %135 = vmatpush1.msra.mxu0 0.0
    %136 = vmatprep.subr.mxu0 0.0
    %137 = vmatpush1.msra.mxu0 0.0
    %138 = vmatprep.subr.mxu0 0.0
    %139 = vmatpush1.msra.mxu0 0.0
    %140 = vmatprep.subr.mxu0 0.0
    %141 = vmatpush1.msra.mxu0 0.0
    %142 = vmatprep.subr.mxu0 0.0
    %143 = vmatpush1.msra.mxu0 0.0
    %144 = vmatprep.subr.mxu0 0.0
    %145 = vmatpush1.msra.mxu0 0.0
    %146 = vmatprep.subr.mxu0 0.0
    %147 = vmatpush1.msra.mxu0 0.0
    %148 = vmatprep.subr.mxu0 0.0
    %149 = vmatpush1.msra.mxu0 0.0
    %150 = vmatprep.subr.mxu0 0.0
    %151 = vmatpush1.msra.mxu0 0.0
    %152 = vmatprep.subr.mxu0 0.0
    %153 = vmatpush1.msra.mxu0 0.0
    %154 = vmatprep.subr.mxu0 0.0
    %155 = vmatpush1.msra.mxu0 0.0
    %156 = vmatprep.subr.mxu0 0.0
    %157 = vmatpush1.msra.mxu0 0.0
    %158 = vmatprep.subr.mxu0 0.0
    %159 = vmatpush1.msra.mxu0 0.0
    %160 = vmatprep.subr.mxu0 0.0
    %161 = vmatpush1.msra.mxu0 0.0
    %162 = vmatprep.subr.mxu0 0.0
    %163 = vmatpush1.msra.mxu0 0.0
    %164 = vmatprep.mubr.f32.mxu0 0.0
    %165 = vmatmul.mubr.f32.gmra.mrb[0].mxu0 %v95
    %v166 = vpop.f32.mrb[0].mxu0
    %v167 = vadd.f32 0.0, %v166
    %v168 = vpop.f32.mrb[0].mxu0
    %169 = vmatprep.mubr.f32.mxu0 0.0
    %170 = vmatmul.mubr.f32.gmra.mrb[0].mxu0 %v98
    %v171 = vpop.f32.mrb[0].mxu0
    %v172 = vadd.f32 0.0, %v171
    %v173 = vpop.f32.mrb[0].mxu0
    %174 = vdwg.mxu0
    %vm175 = vcmask 400384
    %v177 = vsel %vm175, %v83, 0
    %v180 = vsel %vm175, %v84, 0
    %vm182 = vcmask 1040384
    %v184 = vsel %vm182, %v91, 0
    %186 = vmatprep.subr.mxu0 0.0
    %187 = vmatpush1.msra.mxu0 %v85
    %188 = vmatprep.subr.mxu0 0.0
    %189 = vmatpush1.msra.mxu0 %v86
    %190 = vmatprep.subr.mxu0 0.0
    %191 = vmatpush1.msra.mxu0 %v87
    %192 = vmatprep.subr.mxu0 0.0
    %193 = vmatpush1.msra.mxu0 %v88
    %194 = vmatprep.subr.mxu0 0.0
    %195 = vmatpush1.msra.mxu0 %v89
    %196 = vmatprep.subr.mxu0 0.0
    %197 = vmatpush1.msra.mxu0 %v90
    %198 = vmatprep.subr.mxu0 0.0
    %199 = vmatpush1.msra.mxu0 %v184
    %200 = vmatprep.subr.mxu0 0.0
    %201 = vmatpush1.msra.mxu0 0.0
    %202 = vmatprep.subr.mxu0 0.0
    %203 = vmatpush1.msra.mxu0 0.0
    %204 = vmatprep.subr.mxu0 0.0
    %205 = vmatpush1.msra.mxu0 0.0
    %206 = vmatprep.subr.mxu0 0.0
    %207 = vmatpush1.msra.mxu0 0.0
    %208 = vmatprep.subr.mxu0 0.0
    %209 = vmatpush1.msra.mxu0 0.0
    %210 = vmatprep.subr.mxu0 0.0
    %211 = vmatpush1.msra.mxu0 0.0
    %212 = vmatprep.subr.mxu0 0.0
    %213 = vmatpush1.msra.mxu0 0.0
    %214 = vmatprep.subr.mxu0 0.0
    %215 = vmatpush1.msra.mxu0 0.0
    %216 = vmatprep.subr.mxu0 0.0
    %217 = vmatpush1.msra.mxu0 0.0
    %218 = vmatprep.subr.mxu0 0.0
    %219 = vmatpush1.msra.mxu0 0.0
    %220 = vmatprep.subr.mxu0 0.0
    %221 = vmatpush1.msra.mxu0 0.0
    %222 = vmatprep.subr.mxu0 0.0
    %223 = vmatpush1.msra.mxu0 0.0
    %224 = vmatprep.subr.mxu0 0.0
    %225 = vmatpush1.msra.mxu0 0.0
    %226 = vmatprep.subr.mxu0 0.0
    %227 = vmatpush1.msra.mxu0 0.0
    %228 = vmatprep.subr.mxu0 0.0
    %229 = vmatpush1.msra.mxu0 0.0
    %230 = vmatprep.subr.mxu0 0.0
    %231 = vmatpush1.msra.mxu0 0.0
    %232 = vmatprep.subr.mxu0 0.0
    %233 = vmatpush1.msra.mxu0 0.0
    %234 = vmatprep.subr.mxu0 0.0
    %235 = vmatpush1.msra.mxu0 0.0
    %236 = vmatprep.subr.mxu0 0.0
    %237 = vmatpush1.msra.mxu0 0.0
    %238 = vmatprep.subr.mxu0 0.0
    %239 = vmatpush1.msra.mxu0 0.0
    %240 = vmatprep.subr.mxu0 0.0
    %241 = vmatpush1.msra.mxu0 0.0
    %242 = vmatprep.subr.mxu0 0.0
    %243 = vmatpush1.msra.mxu0 0.0
    %244 = vmatprep.subr.mxu0 0.0
    %245 = vmatpush1.msra.mxu0 0.0
    %246 = vmatprep.subr.mxu0 0.0
    %247 = vmatpush1.msra.mxu0 0.0
    %248 = vmatprep.subr.mxu0 0.0
    %249 = vmatpush1.msra.mxu0 0.0
    %250 = vmatprep.mubr.f32.mxu0 0.0
    %251 = vmatmul.mubr.f32.gmra.mrb[0].mxu0 %v177
    %v252 = vpop.f32.mrb[0].mxu0
    %v253 = vadd.f32 %v167, %v252
    %v254 = vpop.f32.mrb[0].mxu0
    %255 = vmatprep.mubr.f32.mxu0 0.0
    %256 = vmatmul.mubr.f32.gmra.mrb[0].mxu0 %v180
    %v257 = vpop.f32.mrb[0].mxu0
    %v258 = vadd.f32 %v172, %v257
    %v259 = vpop.f32.mrb[0].mxu0
    %260 = vdwg.mxu0
    %261 = vadd.xlane.f32.xlu0 %v253
    %v262 = vpop.xlane.xlu0 %261
    %263 = vadd.xlane.f32.xlu0 %v258
    %v264 = vpop.xlane.xlu0 %263
    %v265 = vmul.f32 %v262, 0.04761905
    %v266 = vmul.f32 %v264, 0.04761905
    %v267 = vsub.f32 %v253, %v265
    %v268 = vsub.f32 %v258, %v266
    %v269 = vmul.f32 %v267, %v267
    %v270 = vmul.f32 %v268, %v268
    %271 = vadd.xlane.f32.xlu0 %v269
    %v272 = vpop.xlane.xlu0 %271
    %273 = vadd.xlane.f32.xlu0 %v270
    %v274 = vpop.xlane.xlu0 %273
    %v275 = vmul.f32 %v265, 107.0
    %v276 = vmul.f32 %v266, 107.0
    %v277 = vmul.f32 %v275, %v265
    %v278 = vmul.f32 %v276, %v266
    %v279 = vsub.f32 %v272, %v277
    %v280 = vsub.f32 %v274, %v278
    %v281 = vmul.f32 %v279, 0.04761905
    %v282 = vmul.f32 %v280, 0.04761905
    %v283 = vmax.f32 %v281, 0.0
    %v284 = vmax.f32 %v282, 0.0
    %v285 = vadd.f32 %v283, 1e-05
    %v286 = vadd.f32 %v284, 1e-05
    %v287 = vrsqrt.pop %v285
    %v288 = vrsqrt.pop %v286
    %v289 = vmul.f32 %v267, %v287
    %v290 = vmul.f32 %v268, %v288
    %v291 = vld [vmem:[%s3] sm:$0x1]
    %v293 = vlaneseq
    %v294 = vshrl.u32 %v293, 7
    %v295 = vsub.s32 0, %v294
    %v296 = vrot.slane %v291, %v295
    %v298 = vmul.f32 %v289, %v296
    %v299 = vmul.f32 %v290, %v296
    %v300 = vld [vmem:[%s4] sm:$0x1]
    %v302 = vlaneseq
    %v303 = vshrl.u32 %v302, 7
    %v304 = vsub.s32 0, %v303
    %v305 = vrot.slane %v300, %v304
    %v307 = vadd.f32 %v298, %v305
    %v308 = vadd.f32 %v299, %v305
    %309 = vst [vmem:[#allocation5] sm:$0xff] %v307
    %310 = vst [vmem:[#allocation5 + $0x8] sm:$0xff] %v308
    // Predicated region
    $region26: #{tpu_custom_call.1} parent=1 // pred_check
      _
    $region27: #{tpu_custom_call.1} parent=1 // pred_check_branch
      %312 = sbr.rel (0) target = $region29
    $region28: #{tpu_custom_call.1} parent=1 // pred_region
      %s314 = ssub.s32 256, 256
      %315 = vsyncadd [#allocation4], %s314
      %s316 = sshll.u32 [#allocation5], 4
      %s317 = int_to_ptr.vmem [resolvable:$true] %s316
      %322 = dma.vmem_to_hbm [thread:$0]  %s317, 256, %s5, [#allocation4], 128, 128, 8
    $region29: #{tpu_custom_call.1} parent=1 // pred_fallthru
      _
    // Predicated region
    $region30: #{tpu_custom_call.1} parent=1 // pred_check
      _
    $region31: #{tpu_custom_call.1} parent=1 // pred_check_branch
      %324 = sbr.rel (0) target = $region33
    $region32: #{tpu_custom_call.1} parent=1 // pred_region
      %325 = dma.done [#allocation4], 256
    $region33: #{tpu_custom_call.1} parent=1 // pred_fallthru
      _
    %326 = vsyncpa [#allocation3], 1
    %327 = vsyncpa [#allocation4], 1

</llo_original>
